<compile_context>
chip_gen: v7x
topology: tpu7x:2x2x1
jax: 0.10.0
libtpu: 0.0.40
codegen_flags: <defaults>
</compile_context>

<pallas_src>
import functools

import jax
import jax.numpy as jnp
from jax.experimental import pallas as pl
from jax.experimental.pallas import tpu as pltpu


def _num_tensorcores() -> int:
    """Best-effort TensorCores-per-chip (2 on v7x, 1 on v5e/v6e). Never raises."""
    try:
        info = pltpu.get_tpu_info()
        for attr in ("num_cores", "tensorcore_count", "num_tensorcores",
                     "cores_per_chip"):
            v = getattr(info, attr, None)
            if v is not None and int(v) > 0:
                return int(v)
    except Exception:
        pass
    try:
        kind = jax.devices()[0].device_kind.lower()
        if "v7" in kind:
            return 2
    except Exception:
        pass
    return 1


def _pick_tc(C: int, n_tc: int) -> int:
    """Channel tile width.

    Single-TC parts: full C (one contiguous input slab + one contiguous output
    slab, single grid step -> minimal per-step overhead, max achieved HBM BW).
    Multi-TC parts: largest lane-aligned tile that splits the channel axis
    evenly across the TensorCores.
    """
    if C % 128 != 0:
        # Fallback: full channel extent (block dim == full array dim is legal,
        # but lane-padded / slower). Correct in all cases.
        return C
    if n_tc <= 1:
        return C
    per_core = C // n_tc
    if per_core >= 128 and per_core % 128 == 0:
        return per_core
    return 128


def _permute_scale_kernel(scale_ref, x_ref, o_ref, *, tC, C):
    # scale_ref: (1, C)      per-channel scale, VMEM-resident (constant block)
    # x_ref    : (1, HW, tC) input tile (channels on the lane axis)
    # o_ref    : (1, tC, HW) output tile (NCHW layout, HW flattened on lanes)
    if tC == C:
        scale = scale_ref[...]                       # (1, C)
    else:
        c = pl.program_id(1)
        start = pl.multiple_of(c * tC, 128)          # tC is a multiple of 128
        scale = scale_ref[:, pl.ds(start, tC)]       # (1, tC) lane-aligned slice
    x = x_ref[0]                                     # (HW, tC)
    scaled = x * scale                               # VPU broadcast multiply
    # XLU transpose -> (tC, HW). Ragged 196-lane result is hidden under DMA at
    # this size (verified clean on-chip); see review lever #5 if it ever isn't.
    o_ref[0] = scaled.T


def permute_nhwc_to_nchw_scale(x_nhwc: jax.Array, scale_c: jax.Array) -> jax.Array:
    """out[n, c, h, w] = scale[c] * x[n, h, w, c]  (== permute([0,3,1,2]) * scale)."""
    N, H, W, C = x_nhwc.shape
    HW = H * W

    tC = _pick_tc(C, _num_tensorcores())

    x2d = x_nhwc.reshape(N, HW, C)        # free reshape (same memory layout)
    scale_row = scale_c.reshape(1, C)

    grid = (N, C // tC)

    kernel = functools.partial(_permute_scale_kernel, tC=tC, C=C)

    out2d = pl.pallas_call(
        kernel,
        out_shape=jax.ShapeDtypeStruct((N, C, HW), x_nhwc.dtype),
        grid_spec=pltpu.PrefetchScalarGridSpec(
            num_scalar_prefetch=0,
            grid=grid,
            in_specs=[
                # Full scale row, constant block index -> fetched once, resident.
                pl.BlockSpec((1, C), lambda n, c: (0, 0)),
                # x tile: channels (lane axis) windowed by the grid.
                pl.BlockSpec((1, HW, tC), lambda n, c: (n, 0, c)),
            ],
            out_specs=pl.BlockSpec((1, tC, HW), lambda n, c: (n, c, 0)),
        ),
        compiler_params=pltpu.CompilerParams(
            # Every grid point writes a distinct output block -> both parallel.
            # On v7x the two TensorCores split the (evenly divisible) grid;
            # no-op on v5e/v6e.
            dimension_semantics=("parallel", "parallel"),
        ),
    )(scale_row, x2d)

    return out2d.reshape(N, C, H, W)      # free reshape (same memory layout)


if __name__ == "__main__":
    # Shapes from the original module: x300 [1, 14, 14, 768], layer_scale [768, 1, 1].
    N, H, W, C = 1, 14, 14, 768
    key = jax.random.PRNGKey(0)
    kx, ks = jax.random.split(key)
    x = jax.random.normal(kx, (N, H, W, C), dtype=jnp.float32)
    layer_scale = jax.random.uniform(ks, (C, 1, 1), dtype=jnp.float32)

    out = permute_nhwc_to_nchw_scale(x, layer_scale.reshape(C))
    out = jax.block_until_ready(out)

    # Reference: torch.permute(x, [0, 3, 1, 2]) * layer_scale
    ref = jnp.transpose(x, (0, 3, 1, 2)) * layer_scale.reshape(1, C, 1, 1)
    assert out.shape == (N, C, H, W)
    assert jnp.allclose(out, ref, atol=1e-6, rtol=1e-6), "mismatch vs reference"

    print("KERNEL_OK")
</pallas_src>

<mosaic_0001>
module attributes {stable_mosaic.version = 11 : i64} {
  func.func @_permute_scale_kernel(%arg0: i32, %arg1: i32, %arg2: memref<1x768xf32, #tpu.memory_space<vmem>>, %arg3: memref<1x196x768xf32, #tpu.memory_space<vmem>>, %arg4: memref<1x768x196xf32, #tpu.memory_space<vmem>>) attributes {dimension_semantics = [#tpu.dimension_semantics<parallel>, #tpu.dimension_semantics<parallel>], iteration_bounds = array<i64: 1, 1>, scalar_prefetch = 0 : i64, scratch_operands = 0 : i64, tpu.core_type = #tpu.core_type<tc>, window_params = [{pipeline_mode = #tpu.pipeline_mode<synchronous>, transform_indices = @transform_0, window_bounds = array<i64: 1, 768>}, {transform_indices = @transform_1, window_bounds = array<i64: 1, 196, 768>}, {transform_indices = @transform_2, window_bounds = array<i64: 1, 768, 196>}]} {
    %c0 = arith.constant 0 : index
    %c0_0 = arith.constant 0 : index
    %0 = vector.load %arg2[%c0, %c0_0] : memref<1x768xf32, #tpu.memory_space<vmem>>, vector<1x768xf32>
    %c0_1 = arith.constant 0 : index
    %c0_2 = arith.constant 0 : index
    %c0_3 = arith.constant 0 : index
    %1 = vector.load %arg3[%c0_1, %c0_2, %c0_3] : memref<1x196x768xf32, #tpu.memory_space<vmem>>, vector<1x196x768xf32>
    %2 = vector.shape_cast %1 : vector<1x196x768xf32> to vector<196x768xf32>
    %3 = vector.broadcast %0 : vector<1x768xf32> to vector<196x768xf32>
    %4 = arith.mulf %2, %3 : vector<196x768xf32>
    %5 = tpu.transpose %4, [1, 0] : vector<196x768xf32> -> vector<768x196xf32>
    %c0_4 = arith.constant 0 : index
    %c0_5 = arith.constant 0 : index
    %c0_6 = arith.constant 0 : index
    %6 = vector.load %arg4[%c0_4, %c0_5, %c0_6] : memref<1x768x196xf32, #tpu.memory_space<vmem>>, vector<1x768x196xf32>
    %7 = vector.shape_cast %6 : vector<1x768x196xf32> to vector<768x196xf32>
    %8 = vector.shape_cast %5 : vector<768x196xf32> to vector<1x768x196xf32>
    tpu.vector_store %arg4[%c0_4, %c0_5, %c0_6], %8 {strides = array<i32>} : memref<1x768x196xf32, #tpu.memory_space<vmem>>, vector<1x768x196xf32>,
    return
  }
  func.func @transform_0(%arg0: i32, %arg1: i32) -> (i32, i32) {
    %c0_i32 = arith.constant 0 : i32
    %c0_i32_0 = arith.constant 0 : i32
    %c0_i32_1 = arith.constant 0 : i32
    return %c0_i32, %c0_i32_0 : i32, i32
  }
  func.func @transform_1(%arg0: i32, %arg1: i32) -> (i32, i32, i32) {
    %c0_i32 = arith.constant 0 : i32
    %c0_i32_0 = arith.constant 0 : i32
    return %arg0, %c0_i32, %arg1 : i32, i32, i32
  }
  func.func @transform_2(%arg0: i32, %arg1: i32) -> (i32, i32, i32) {
    %c0_i32 = arith.constant 0 : i32
    %c0_i32_0 = arith.constant 0 : i32
    return %arg0, %arg1, %c0_i32 : i32, i32, i32
  }
}

</mosaic_0001>

<llo_original>
// kernel: tpu_custom_call.1
$region0: #{tpu_custom_call.1}
  #allocation0 [shape = 'u32[]', space=smem, size = 0x4, offset = 0x4, fixed_abs, tag = 'smem constant byte address 0x4 - core index']
  #allocation1 [shape = 'u32[144,128]{1,0:T(1,128)}', space=vmem, size = 0x12000, scoped, tag = 'internal scratch']
  %s0 = inlined_call_operand.vmem [shape: f32[1,768], index: 0, kind: input, shape index: {}]
  %s1 = inlined_call_operand.vmem [shape: f32[1,196,768], index: 1, kind: input, shape index: {}]
  %s2 = inlined_call_operand.vmem [shape: f32[1,768,196], index: 2, kind: output, shape index: {}]
  %s3 = sld [smem:[#allocation0]]
  $region18: #{tpu_custom_call.1} parent=0
    _
  %s5 = ssub.s32 1, %s3
  %s6 = scalar_select 0, %s5, %s3
  // Predicated region
  $region2: #{tpu_custom_call.1} parent=0 // pred_check
    _
  $region3: #{tpu_custom_call.1} parent=0 // pred_check_branch
    %8 = sbr.rel (0) target = $region5
  $region4: #{tpu_custom_call.1} parent=0 // pred_region
    _
  $region5: #{tpu_custom_call.1} parent=0 // pred_fallthru
    _
  // Predicated region
  $region6: #{tpu_custom_call.1} parent=0 // pred_check
    _
  $region7: #{tpu_custom_call.1} parent=0 // pred_check_branch
    %10 = sbr.rel (0) target = $region9
  $region8: #{tpu_custom_call.1} parent=0 // pred_region
    _
  $region9: #{tpu_custom_call.1} parent=0 // pred_fallthru
    _
  %v11 = vld [vmem:[%s0] sm:$0x3f]
  %v12 = vld [vmem:[%s1] sm:$0xff]
  %v13 = vld [vmem:[%s1 + $0x8] sm:$0xff]
  %v14 = vld [vmem:[%s1 + $0x10] sm:$0xff]
  %v15 = vld [vmem:[%s1 + $0x18] sm:$0xff]
  %v16 = vld [vmem:[%s1 + $0x20] sm:$0xff]
  %v17 = vld [vmem:[%s1 + $0x28] sm:$0xff]
  %v18 = vld [vmem:[%s1 + $0x30] sm:$0xff]
  %v19 = vld [vmem:[%s1 + $0x38] sm:$0xff]
  %v20 = vld [vmem:[%s1 + $0x40] sm:$0xff]
  %v21 = vld [vmem:[%s1 + $0x48] sm:$0xff]
  %v22 = vld [vmem:[%s1 + $0x50] sm:$0xff]
  %v23 = vld [vmem:[%s1 + $0x58] sm:$0xff]
  %v24 = vld [vmem:[%s1 + $0x60] sm:$0xff]
  %v25 = vld [vmem:[%s1 + $0x68] sm:$0xff]
  %v26 = vld [vmem:[%s1 + $0x70] sm:$0xff]
  %v27 = vld [vmem:[%s1 + $0x78] sm:$0xff]
  %v28 = vld [vmem:[%s1 + $0x80] sm:$0xff]
  %v29 = vld [vmem:[%s1 + $0x88] sm:$0xff]
  %v30 = vld [vmem:[%s1 + $0x90] sm:$0xff]
  %v31 = vld [vmem:[%s1 + $0x98] sm:$0xff]
  %v32 = vld [vmem:[%s1 + $0xa0] sm:$0xff]
  %v33 = vld [vmem:[%s1 + $0xa8] sm:$0xff]
  %v34 = vld [vmem:[%s1 + $0xb0] sm:$0xff]
  %v35 = vld [vmem:[%s1 + $0xb8] sm:$0xff]
  %v36 = vld [vmem:[%s1 + $0xc0] sm:$0xff]
  %v37 = vld [vmem:[%s1 + $0xc8] sm:$0xff]
  %v38 = vld [vmem:[%s1 + $0xd0] sm:$0xff]
  %v39 = vld [vmem:[%s1 + $0xd8] sm:$0xff]
  %v40 = vld [vmem:[%s1 + $0xe0] sm:$0xff]
  %v41 = vld [vmem:[%s1 + $0xe8] sm:$0xff]
  %v42 = vld [vmem:[%s1 + $0xf0] sm:$0xff]
  %v43 = vld [vmem:[%s1 + $0xf8] sm:$0xff]
  %v44 = vld [vmem:[%s1 + $0x100] sm:$0xff]
  %v45 = vld [vmem:[%s1 + $0x108] sm:$0xff]
  %v46 = vld [vmem:[%s1 + $0x110] sm:$0xff]
  %v47 = vld [vmem:[%s1 + $0x118] sm:$0xff]
  %v48 = vld [vmem:[%s1 + $0x120] sm:$0xff]
  %v49 = vld [vmem:[%s1 + $0x128] sm:$0xff]
  %v50 = vld [vmem:[%s1 + $0x130] sm:$0xff]
  %v51 = vld [vmem:[%s1 + $0x138] sm:$0xff]
  %v52 = vld [vmem:[%s1 + $0x140] sm:$0xff]
  %v53 = vld [vmem:[%s1 + $0x148] sm:$0xff]
  %v54 = vld [vmem:[%s1 + $0x150] sm:$0xff]
  %v55 = vld [vmem:[%s1 + $0x158] sm:$0xff]
  %v56 = vld [vmem:[%s1 + $0x160] sm:$0xff]
  %v57 = vld [vmem:[%s1 + $0x168] sm:$0xff]
  %v58 = vld [vmem:[%s1 + $0x170] sm:$0xff]
  %v59 = vld [vmem:[%s1 + $0x178] sm:$0xff]
  %v60 = vld [vmem:[%s1 + $0x180] sm:$0xff]
  %v61 = vld [vmem:[%s1 + $0x188] sm:$0xff]
  %v62 = vld [vmem:[%s1 + $0x190] sm:$0xff]
  %v63 = vld [vmem:[%s1 + $0x198] sm:$0xff]
  %v64 = vld [vmem:[%s1 + $0x1a0] sm:$0xff]
  %v65 = vld [vmem:[%s1 + $0x1a8] sm:$0xff]
  %v66 = vld [vmem:[%s1 + $0x1b0] sm:$0xff]
  %v67 = vld [vmem:[%s1 + $0x1b8] sm:$0xff]
  %v68 = vld [vmem:[%s1 + $0x1c0] sm:$0xff]
  %v69 = vld [vmem:[%s1 + $0x1c8] sm:$0xff]
  %v70 = vld [vmem:[%s1 + $0x1d0] sm:$0xff]
  %v71 = vld [vmem:[%s1 + $0x1d8] sm:$0xff]
  %v72 = vld [vmem:[%s1 + $0x1e0] sm:$0xff]
  %v73 = vld [vmem:[%s1 + $0x1e8] sm:$0xff]
  %v74 = vld [vmem:[%s1 + $0x1f0] sm:$0xff]
  %v75 = vld [vmem:[%s1 + $0x1f8] sm:$0xff]
  %v76 = vld [vmem:[%s1 + $0x200] sm:$0xff]
  %v77 = vld [vmem:[%s1 + $0x208] sm:$0xff]
  %v78 = vld [vmem:[%s1 + $0x210] sm:$0xff]
  %v79 = vld [vmem:[%s1 + $0x218] sm:$0xff]
  %v80 = vld [vmem:[%s1 + $0x220] sm:$0xff]
  %v81 = vld [vmem:[%s1 + $0x228] sm:$0xff]
  %v82 = vld [vmem:[%s1 + $0x230] sm:$0xff]
  %v83 = vld [vmem:[%s1 + $0x238] sm:$0xff]
  %v84 = vld [vmem:[%s1 + $0x240] sm:$0xff]
  %v85 = vld [vmem:[%s1 + $0x248] sm:$0xff]
  %v86 = vld [vmem:[%s1 + $0x250] sm:$0xff]
  %v87 = vld [vmem:[%s1 + $0x258] sm:$0xff]
  %v88 = vld [vmem:[%s1 + $0x260] sm:$0xff]
  %v89 = vld [vmem:[%s1 + $0x268] sm:$0xff]
  %v90 = vld [vmem:[%s1 + $0x270] sm:$0xff]
  %v91 = vld [vmem:[%s1 + $0x278] sm:$0xff]
  %v92 = vld [vmem:[%s1 + $0x280] sm:$0xff]
  %v93 = vld [vmem:[%s1 + $0x288] sm:$0xff]
  %v94 = vld [vmem:[%s1 + $0x290] sm:$0xff]
  %v95 = vld [vmem:[%s1 + $0x298] sm:$0xff]
  %v96 = vld [vmem:[%s1 + $0x2a0] sm:$0xff]
  %v97 = vld [vmem:[%s1 + $0x2a8] sm:$0xff]
  %v98 = vld [vmem:[%s1 + $0x2b0] sm:$0xff]
  %v99 = vld [vmem:[%s1 + $0x2b8] sm:$0xff]
  %v100 = vld [vmem:[%s1 + $0x2c0] sm:$0xff]
  %v101 = vld [vmem:[%s1 + $0x2c8] sm:$0xff]
  %v102 = vld [vmem:[%s1 + $0x2d0] sm:$0xff]
  %v103 = vld [vmem:[%s1 + $0x2d8] sm:$0xff]
  %v104 = vld [vmem:[%s1 + $0x2e0] sm:$0xff]
  %v105 = vld [vmem:[%s1 + $0x2e8] sm:$0xff]
  %v106 = vld [vmem:[%s1 + $0x2f0] sm:$0xff]
  %v107 = vld [vmem:[%s1 + $0x2f8] sm:$0xff]
  %v108 = vld [vmem:[%s1 + $0x300] sm:$0xff]
  %v109 = vld [vmem:[%s1 + $0x308] sm:$0xff]
  %v110 = vld [vmem:[%s1 + $0x310] sm:$0xff]
  %v111 = vld [vmem:[%s1 + $0x318] sm:$0xff]
  %v112 = vld [vmem:[%s1 + $0x320] sm:$0xff]
  %v113 = vld [vmem:[%s1 + $0x328] sm:$0xff]
  %v114 = vld [vmem:[%s1 + $0x330] sm:$0xff]
  %v115 = vld [vmem:[%s1 + $0x338] sm:$0xff]
  %v116 = vld [vmem:[%s1 + $0x340] sm:$0xff]
  %v117 = vld [vmem:[%s1 + $0x348] sm:$0xff]
  %v118 = vld [vmem:[%s1 + $0x350] sm:$0xff]
  %v119 = vld [vmem:[%s1 + $0x358] sm:$0xff]
  %v120 = vld [vmem:[%s1 + $0x360] sm:$0xff]
  %v121 = vld [vmem:[%s1 + $0x368] sm:$0xff]
  %v122 = vld [vmem:[%s1 + $0x370] sm:$0xff]
  %v123 = vld [vmem:[%s1 + $0x378] sm:$0xff]
  %v124 = vld [vmem:[%s1 + $0x380] sm:$0xff]
  %v125 = vld [vmem:[%s1 + $0x388] sm:$0xff]
  %v126 = vld [vmem:[%s1 + $0x390] sm:$0xff]
  %v127 = vld [vmem:[%s1 + $0x398] sm:$0xff]
  %v128 = vld [vmem:[%s1 + $0x3a0] sm:$0xff]
  %v129 = vld [vmem:[%s1 + $0x3a8] sm:$0xff]
  %v130 = vld [vmem:[%s1 + $0x3b0] sm:$0xff]
  %v131 = vld [vmem:[%s1 + $0x3b8] sm:$0xff]
  %v132 = vld [vmem:[%s1 + $0x3c0] sm:$0xff]
  %v133 = vld [vmem:[%s1 + $0x3c8] sm:$0xff]
  %v134 = vld [vmem:[%s1 + $0x3d0] sm:$0xff]
  %v135 = vld [vmem:[%s1 + $0x3d8] sm:$0xff]
  %v136 = vld [vmem:[%s1 + $0x3e0] sm:$0xff]
  %v137 = vld [vmem:[%s1 + $0x3e8] sm:$0xff]
  %v138 = vld [vmem:[%s1 + $0x3f0] sm:$0xff]
  %v139 = vld [vmem:[%s1 + $0x3f8] sm:$0xff]
  %v140 = vld [vmem:[%s1 + $0x400] sm:$0xff]
  %v141 = vld [vmem:[%s1 + $0x408] sm:$0xff]
  %v142 = vld [vmem:[%s1 + $0x410] sm:$0xff]
  %v143 = vld [vmem:[%s1 + $0x418] sm:$0xff]
  %v144 = vld [vmem:[%s1 + $0x420] sm:$0xff]
  %v145 = vld [vmem:[%s1 + $0x428] sm:$0xff]
  %v146 = vld [vmem:[%s1 + $0x430] sm:$0xff]
  %v147 = vld [vmem:[%s1 + $0x438] sm:$0xff]
  %v148 = vld [vmem:[%s1 + $0x440] sm:$0xff]
  %v149 = vld [vmem:[%s1 + $0x448] sm:$0xff]
  %v150 = vld [vmem:[%s1 + $0x450] sm:$0xff]
  %v151 = vld [vmem:[%s1 + $0x458] sm:$0xff]
  %v152 = vld [vmem:[%s1 + $0x460] sm:$0xff]
  %v153 = vld [vmem:[%s1 + $0x468] sm:$0xff]
  %v154 = vld [vmem:[%s1 + $0x470] sm:$0xff]
  %v155 = vld [vmem:[%s1 + $0x478] sm:$0xff]
  %v156 = vld [vmem:[%s1 + $0x480] sm:$0xf]
  %v157 = vld [vmem:[%s1 + $0x488] sm:$0xf]
  %v158 = vld [vmem:[%s1 + $0x490] sm:$0xf]
  %v159 = vld [vmem:[%s1 + $0x498] sm:$0xf]
  %v160 = vld [vmem:[%s1 + $0x4a0] sm:$0xf]
  %v161 = vld [vmem:[%s1 + $0x4a8] sm:$0xf]
  %v163 = vlaneseq
  %v164 = vshrl.u32 %v163, 7
  %v165 = vsub.s32 0, %v164
  %v166 = vrot.slane %v11, %v165
  %v167 = vlaneseq
  %v168 = vshrl.u32 %v167, 7
  %v169 = vsub.s32 1, %v168
  %v170 = vrot.slane %v11, %v169
  %v171 = vlaneseq
  %v172 = vshrl.u32 %v171, 7
  %v173 = vsub.s32 2, %v172
  %v174 = vrot.slane %v11, %v173
  %v175 = vlaneseq
  %v176 = vshrl.u32 %v175, 7
  %v177 = vsub.s32 3, %v176
  %v178 = vrot.slane %v11, %v177
  %v179 = vlaneseq
  %v180 = vshrl.u32 %v179, 7
  %v181 = vsub.s32 4, %v180
  %v182 = vrot.slane %v11, %v181
  %v183 = vlaneseq
  %v184 = vshrl.u32 %v183, 7
  %v185 = vsub.s32 5, %v184
  %v186 = vrot.slane %v11, %v185
  %v193 = vmul.f32 %v12, %v166
  %v194 = vmul.f32 %v13, %v170
  %v195 = vmul.f32 %v14, %v174
  %v196 = vmul.f32 %v15, %v178
  %v197 = vmul.f32 %v16, %v182
  %v198 = vmul.f32 %v17, %v186
  %v199 = vmul.f32 %v18, %v166
  %v200 = vmul.f32 %v19, %v170
  %v201 = vmul.f32 %v20, %v174
  %v202 = vmul.f32 %v21, %v178
  %v203 = vmul.f32 %v22, %v182
  %v204 = vmul.f32 %v23, %v186
  %v205 = vmul.f32 %v24, %v166
  %v206 = vmul.f32 %v25, %v170
  %v207 = vmul.f32 %v26, %v174
  %v208 = vmul.f32 %v27, %v178
  %v209 = vmul.f32 %v28, %v182
  %v210 = vmul.f32 %v29, %v186
  %v211 = vmul.f32 %v30, %v166
  %v212 = vmul.f32 %v31, %v170
  %v213 = vmul.f32 %v32, %v174
  %v214 = vmul.f32 %v33, %v178
  %v215 = vmul.f32 %v34, %v182
  %v216 = vmul.f32 %v35, %v186
  %v217 = vmul.f32 %v36, %v166
  %v218 = vmul.f32 %v37, %v170
  %v219 = vmul.f32 %v38, %v174
  %v220 = vmul.f32 %v39, %v178
  %v221 = vmul.f32 %v40, %v182
  %v222 = vmul.f32 %v41, %v186
  %v223 = vmul.f32 %v42, %v166
  %v224 = vmul.f32 %v43, %v170
  %v225 = vmul.f32 %v44, %v174
  %v226 = vmul.f32 %v45, %v178
  %v227 = vmul.f32 %v46, %v182
  %v228 = vmul.f32 %v47, %v186
  %v229 = vmul.f32 %v48, %v166
  %v230 = vmul.f32 %v49, %v170
  %v231 = vmul.f32 %v50, %v174
  %v232 = vmul.f32 %v51, %v178
  %v233 = vmul.f32 %v52, %v182
  %v234 = vmul.f32 %v53, %v186
  %v235 = vmul.f32 %v54, %v166
  %v236 = vmul.f32 %v55, %v170
  %v237 = vmul.f32 %v56, %v174
  %v238 = vmul.f32 %v57, %v178
  %v239 = vmul.f32 %v58, %v182
  %v240 = vmul.f32 %v59, %v186
  %v241 = vmul.f32 %v60, %v166
  %v242 = vmul.f32 %v61, %v170
  %v243 = vmul.f32 %v62, %v174
  %v244 = vmul.f32 %v63, %v178
  %v245 = vmul.f32 %v64, %v182
  %v246 = vmul.f32 %v65, %v186
  %v247 = vmul.f32 %v66, %v166
  %v248 = vmul.f32 %v67, %v170
  %v249 = vmul.f32 %v68, %v174
  %v250 = vmul.f32 %v69, %v178
  %v251 = vmul.f32 %v70, %v182
  %v252 = vmul.f32 %v71, %v186
  %v253 = vmul.f32 %v72, %v166
  %v254 = vmul.f32 %v73, %v170
  %v255 = vmul.f32 %v74, %v174
  %v256 = vmul.f32 %v75, %v178
  %v257 = vmul.f32 %v76, %v182
  %v258 = vmul.f32 %v77, %v186
  %v259 = vmul.f32 %v78, %v166
  %v260 = vmul.f32 %v79, %v170
  %v261 = vmul.f32 %v80, %v174
  %v262 = vmul.f32 %v81, %v178
  %v263 = vmul.f32 %v82, %v182
  %v264 = vmul.f32 %v83, %v186
  %v265 = vmul.f32 %v84, %v166
  %v266 = vmul.f32 %v85, %v170
  %v267 = vmul.f32 %v86, %v174
  %v268 = vmul.f32 %v87, %v178
  %v269 = vmul.f32 %v88, %v182
  %v270 = vmul.f32 %v89, %v186
  %v271 = vmul.f32 %v90, %v166
  %v272 = vmul.f32 %v91, %v170
  %v273 = vmul.f32 %v92, %v174
  %v274 = vmul.f32 %v93, %v178
  %v275 = vmul.f32 %v94, %v182
  %v276 = vmul.f32 %v95, %v186
  %v277 = vmul.f32 %v96, %v166
  %v278 = vmul.f32 %v97, %v170
  %v279 = vmul.f32 %v98, %v174
  %v280 = vmul.f32 %v99, %v178
  %v281 = vmul.f32 %v100, %v182
  %v282 = vmul.f32 %v101, %v186
  %v283 = vmul.f32 %v102, %v166
  %v284 = vmul.f32 %v103, %v170
  %v285 = vmul.f32 %v104, %v174
  %v286 = vmul.f32 %v105, %v178
  %v287 = vmul.f32 %v106, %v182
  %v288 = vmul.f32 %v107, %v186
  %v289 = vmul.f32 %v108, %v166
  %v290 = vmul.f32 %v109, %v170
  %v291 = vmul.f32 %v110, %v174
  %v292 = vmul.f32 %v111, %v178
  %v293 = vmul.f32 %v112, %v182
  %v294 = vmul.f32 %v113, %v186
  %v295 = vmul.f32 %v114, %v166
  %v296 = vmul.f32 %v115, %v170
  %v297 = vmul.f32 %v116, %v174
  %v298 = vmul.f32 %v117, %v178
  %v299 = vmul.f32 %v118, %v182
  %v300 = vmul.f32 %v119, %v186
  %v301 = vmul.f32 %v120, %v166
  %v302 = vmul.f32 %v121, %v170
  %v303 = vmul.f32 %v122, %v174
  %v304 = vmul.f32 %v123, %v178
  %v305 = vmul.f32 %v124, %v182
  %v306 = vmul.f32 %v125, %v186
  %v307 = vmul.f32 %v126, %v166
  %v308 = vmul.f32 %v127, %v170
  %v309 = vmul.f32 %v128, %v174
  %v310 = vmul.f32 %v129, %v178
  %v311 = vmul.f32 %v130, %v182
  %v312 = vmul.f32 %v131, %v186
  %v313 = vmul.f32 %v132, %v166
  %v314 = vmul.f32 %v133, %v170
  %v315 = vmul.f32 %v134, %v174
  %v316 = vmul.f32 %v135, %v178
  %v317 = vmul.f32 %v136, %v182
  %v318 = vmul.f32 %v137, %v186
  %v319 = vmul.f32 %v138, %v166
  %v320 = vmul.f32 %v139, %v170
  %v321 = vmul.f32 %v140, %v174
  %v322 = vmul.f32 %v141, %v178
  %v323 = vmul.f32 %v142, %v182
  %v324 = vmul.f32 %v143, %v186
  %v325 = vmul.f32 %v144, %v166
  %v326 = vmul.f32 %v145, %v170
  %v327 = vmul.f32 %v146, %v174
  %v328 = vmul.f32 %v147, %v178
  %v329 = vmul.f32 %v148, %v182
  %v330 = vmul.f32 %v149, %v186
  %v331 = vmul.f32 %v150, %v166
  %v332 = vmul.f32 %v151, %v170
  %v333 = vmul.f32 %v152, %v174
  %v334 = vmul.f32 %v153, %v178
  %v335 = vmul.f32 %v154, %v182
  %v336 = vmul.f32 %v155, %v186
  %v337 = vmul.f32 %v156, %v166
  %v338 = vmul.f32 %v157, %v170
  %v339 = vmul.f32 %v158, %v174
  %v340 = vmul.f32 %v159, %v178
  %v341 = vmul.f32 %v160, %v182
  %v342 = vmul.f32 %v161, %v186
  %343 = vxpose.xlu0.b32.start [1/16] %v193, 128
  %344 = vxpose.xlu0.b32.cont [2/16] %v199, 128
  %345 = vxpose.xlu0.b32.cont [3/16] %v205, 128
  %346 = vxpose.xlu0.b32.cont [4/16] %v211, 128
  %347 = vxpose.xlu0.b32.cont [5/16] %v217, 128
  %348 = vxpose.xlu0.b32.cont [6/16] %v223, 128
  %349 = vxpose.xlu0.b32.cont [7/16] %v229, 128
  %350 = vxpose.xlu0.b32.cont [8/16] %v235, 128
  %351 = vxpose.xlu0.b32.cont [9/16] %v241, 128
  %352 = vxpose.xlu0.b32.cont [10/16] %v247, 128
  %353 = vxpose.xlu0.b32.cont [11/16] %v253, 128
  %354 = vxpose.xlu0.b32.cont [12/16] %v259, 128
  %355 = vxpose.xlu0.b32.cont [13/16] %v265, 128
  %356 = vxpose.xlu0.b32.cont [14/16] %v271, 128
  %357 = vxpose.xlu0.b32.cont [15/16] %v277, 128
  %358 = vxpose.xlu0.b32.end [16/16] %v283, 128
  %v359 = vpop.trf.xlu0
  %v360 = vpop.trf.xlu0
  %v361 = vpop.trf.xlu0
  %v362 = vpop.trf.xlu0
  %v363 = vpop.trf.xlu0
  %v364 = vpop.trf.xlu0
  %v365 = vpop.trf.xlu0
  %v366 = vpop.trf.xlu0
  %v367 = vpop.trf.xlu0
  %v368 = vpop.trf.xlu0
  %v369 = vpop.trf.xlu0
  %v370 = vpop.trf.xlu0
  %v371 = vpop.trf.xlu0
  %v372 = vpop.trf.xlu0
  %v373 = vpop.trf.xlu0
  %v374 = vpop.trf.xlu0
  %375 = vxpose.xlu0.b32.start [1/16] %v194, 128
  %376 = vxpose.xlu0.b32.cont [2/16] %v200, 128
  %377 = vxpose.xlu0.b32.cont [3/16] %v206, 128
  %378 = vxpose.xlu0.b32.cont [4/16] %v212, 128
  %379 = vxpose.xlu0.b32.cont [5/16] %v218, 128
  %380 = vxpose.xlu0.b32.cont [6/16] %v224, 128
  %381 = vxpose.xlu0.b32.cont [7/16] %v230, 128
  %382 = vxpose.xlu0.b32.cont [8/16] %v236, 128
  %383 = vxpose.xlu0.b32.cont [9/16] %v242, 128
  %384 = vxpose.xlu0.b32.cont [10/16] %v248, 128
  %385 = vxpose.xlu0.b32.cont [11/16] %v254, 128
  %386 = vxpose.xlu0.b32.cont [12/16] %v260, 128
  %387 = vxpose.xlu0.b32.cont [13/16] %v266, 128
  %388 = vxpose.xlu0.b32.cont [14/16] %v272, 128
  %389 = vxpose.xlu0.b32.cont [15/16] %v278, 128
  %390 = vxpose.xlu0.b32.end [16/16] %v284, 128
  %v391 = vpop.trf.xlu0
  %v392 = vpop.trf.xlu0
  %v393 = vpop.trf.xlu0
  %v394 = vpop.trf.xlu0
  %v395 = vpop.trf.xlu0
  %v396 = vpop.trf.xlu0
  %v397 = vpop.trf.xlu0
  %v398 = vpop.trf.xlu0
  %v399 = vpop.trf.xlu0
  %v400 = vpop.trf.xlu0
  %v401 = vpop.trf.xlu0
  %v402 = vpop.trf.xlu0
  %v403 = vpop.trf.xlu0
  %v404 = vpop.trf.xlu0
  %v405 = vpop.trf.xlu0
  %v406 = vpop.trf.xlu0
  %407 = vxpose.xlu0.b32.start [1/16] %v195, 128
  %408 = vxpose.xlu0.b32.cont [2/16] %v201, 128
  %409 = vxpose.xlu0.b32.cont [3/16] %v207, 128
  %410 = vxpose.xlu0.b32.cont [4/16] %v213, 128
  %411 = vxpose.xlu0.b32.cont [5/16] %v219, 128
  %412 = vxpose.xlu0.b32.cont [6/16] %v225, 128
  %413 = vxpose.xlu0.b32.cont [7/16] %v231, 128
  %414 = vxpose.xlu0.b32.cont [8/16] %v237, 128
  %415 = vxpose.xlu0.b32.cont [9/16] %v243, 128
  %416 = vxpose.xlu0.b32.cont [10/16] %v249, 128
  %417 = vxpose.xlu0.b32.cont [11/16] %v255, 128
  %418 = vxpose.xlu0.b32.cont [12/16] %v261, 128
  %419 = vxpose.xlu0.b32.cont [13/16] %v267, 128
  %420 = vxpose.xlu0.b32.cont [14/16] %v273, 128
  %421 = vxpose.xlu0.b32.cont [15/16] %v279, 128
  %422 = vxpose.xlu0.b32.end [16/16] %v285, 128
  %v423 = vpop.trf.xlu0
  %v424 = vpop.trf.xlu0
  %v425 = vpop.trf.xlu0
  %v426 = vpop.trf.xlu0
  %v427 = vpop.trf.xlu0
  %v428 = vpop.trf.xlu0
  %v429 = vpop.trf.xlu0
  %v430 = vpop.trf.xlu0
  %v431 = vpop.trf.xlu0
  %v432 = vpop.trf.xlu0
  %v433 = vpop.trf.xlu0
  %v434 = vpop.trf.xlu0
  %v435 = vpop.trf.xlu0
  %v436 = vpop.trf.xlu0
  %v437 = vpop.trf.xlu0
  %v438 = vpop.trf.xlu0
  %439 = vxpose.xlu0.b32.start [1/16] %v196, 128
  %440 = vxpose.xlu0.b32.cont [2/16] %v202, 128
  %441 = vxpose.xlu0.b32.cont [3/16] %v208, 128
  %442 = vxpose.xlu0.b32.cont [4/16] %v214, 128
  %443 = vxpose.xlu0.b32.cont [5/16] %v220, 128
  %444 = vxpose.xlu0.b32.cont [6/16] %v226, 128
  %445 = vxpose.xlu0.b32.cont [7/16] %v232, 128
  %446 = vxpose.xlu0.b32.cont [8/16] %v238, 128
  %447 = vxpose.xlu0.b32.cont [9/16] %v244, 128
  %448 = vxpose.xlu0.b32.cont [10/16] %v250, 128
  %449 = vxpose.xlu0.b32.cont [11/16] %v256, 128
  %450 = vxpose.xlu0.b32.cont [12/16] %v262, 128
  %451 = vxpose.xlu0.b32.cont [13/16] %v268, 128
  %452 = vxpose.xlu0.b32.cont [14/16] %v274, 128
  %453 = vxpose.xlu0.b32.cont [15/16] %v280, 128
  %454 = vxpose.xlu0.b32.end [16/16] %v286, 128
  %v455 = vpop.trf.xlu0
  %v456 = vpop.trf.xlu0
  %v457 = vpop.trf.xlu0
  %v458 = vpop.trf.xlu0
  %v459 = vpop.trf.xlu0
  %v460 = vpop.trf.xlu0
  %v461 = vpop.trf.xlu0
  %v462 = vpop.trf.xlu0
  %v463 = vpop.trf.xlu0
  %v464 = vpop.trf.xlu0
  %v465 = vpop.trf.xlu0
  %v466 = vpop.trf.xlu0
  %v467 = vpop.trf.xlu0
  %v468 = vpop.trf.xlu0
  %v469 = vpop.trf.xlu0
  %v470 = vpop.trf.xlu0
  %471 = vxpose.xlu0.b32.start [1/16] %v197, 128
  %472 = vxpose.xlu0.b32.cont [2/16] %v203, 128
  %473 = vxpose.xlu0.b32.cont [3/16] %v209, 128
  %474 = vxpose.xlu0.b32.cont [4/16] %v215, 128
  %475 = vxpose.xlu0.b32.cont [5/16] %v221, 128
  %476 = vxpose.xlu0.b32.cont [6/16] %v227, 128
  %477 = vxpose.xlu0.b32.cont [7/16] %v233, 128
  %478 = vxpose.xlu0.b32.cont [8/16] %v239, 128
  %479 = vxpose.xlu0.b32.cont [9/16] %v245, 128
  %480 = vxpose.xlu0.b32.cont [10/16] %v251, 128
  %481 = vxpose.xlu0.b32.cont [11/16] %v257, 128
  %482 = vxpose.xlu0.b32.cont [12/16] %v263, 128
  %483 = vxpose.xlu0.b32.cont [13/16] %v269, 128
  %484 = vxpose.xlu0.b32.cont [14/16] %v275, 128
  %485 = vxpose.xlu0.b32.cont [15/16] %v281, 128
  %486 = vxpose.xlu0.b32.end [16/16] %v287, 128
  %v487 = vpop.trf.xlu0
  %v488 = vpop.trf.xlu0
  %v489 = vpop.trf.xlu0
  %v490 = vpop.trf.xlu0
  %v491 = vpop.trf.xlu0
  %v492 = vpop.trf.xlu0
  %v493 = vpop.trf.xlu0
  %v494 = vpop.trf.xlu0
  %v495 = vpop.trf.xlu0
  %v496 = vpop.trf.xlu0
  %v497 = vpop.trf.xlu0
  %v498 = vpop.trf.xlu0
  %v499 = vpop.trf.xlu0
  %v500 = vpop.trf.xlu0
  %v501 = vpop.trf.xlu0
  %v502 = vpop.trf.xlu0
  %503 = vxpose.xlu0.b32.start [1/16] %v198, 128
  %504 = vxpose.xlu0.b32.cont [2/16] %v204, 128
  %505 = vxpose.xlu0.b32.cont [3/16] %v210, 128
  %506 = vxpose.xlu0.b32.cont [4/16] %v216, 128
  %507 = vxpose.xlu0.b32.cont [5/16] %v222, 128
  %508 = vxpose.xlu0.b32.cont [6/16] %v228, 128
  %509 = vxpose.xlu0.b32.cont [7/16] %v234, 128
  %510 = vxpose.xlu0.b32.cont [8/16] %v240, 128
  %511 = vxpose.xlu0.b32.cont [9/16] %v246, 128
  %512 = vxpose.xlu0.b32.cont [10/16] %v252, 128
  %513 = vxpose.xlu0.b32.cont [11/16] %v258, 128
  %514 = vxpose.xlu0.b32.cont [12/16] %v264, 128
  %515 = vxpose.xlu0.b32.cont [13/16] %v270, 128
  %516 = vxpose.xlu0.b32.cont [14/16] %v276, 128
  %517 = vxpose.xlu0.b32.cont [15/16] %v282, 128
  %518 = vxpose.xlu0.b32.end [16/16] %v288, 128
  %v519 = vpop.trf.xlu0
  %v520 = vpop.trf.xlu0
  %v521 = vpop.trf.xlu0
  %v522 = vpop.trf.xlu0
  %v523 = vpop.trf.xlu0
  %v524 = vpop.trf.xlu0
  %v525 = vpop.trf.xlu0
  %v526 = vpop.trf.xlu0
  %v527 = vpop.trf.xlu0
  %v528 = vpop.trf.xlu0
  %v529 = vpop.trf.xlu0
  %v530 = vpop.trf.xlu0
  %v531 = vpop.trf.xlu0
  %v532 = vpop.trf.xlu0
  %v533 = vpop.trf.xlu0
  %v534 = vpop.trf.xlu0
  %535 = vxpose.xlu0.b32.start [1/16] %v289, 128
  %536 = vxpose.xlu0.b32.cont [2/16] %v295, 128
  %537 = vxpose.xlu0.b32.cont [3/16] %v301, 128
  %538 = vxpose.xlu0.b32.cont [4/16] %v307, 128
  %539 = vxpose.xlu0.b32.cont [5/16] %v313, 128
  %540 = vxpose.xlu0.b32.cont [6/16] %v319, 128
  %541 = vxpose.xlu0.b32.cont [7/16] %v325, 128
  %542 = vxpose.xlu0.b32.cont [8/16] %v331, 128
  %543 = vxpose.xlu0.b32.cont [9/16] %v337, 128
  %544 = vxpose.xlu0.b32.cont [10/16] 0.0, 128
  %545 = vxpose.xlu0.b32.cont [11/16] 0.0, 128
  %546 = vxpose.xlu0.b32.cont [12/16] 0.0, 128
  %547 = vxpose.xlu0.b32.cont [13/16] 0.0, 128
  %548 = vxpose.xlu0.b32.cont [14/16] 0.0, 128
  %549 = vxpose.xlu0.b32.cont [15/16] 0.0, 128
  %550 = vxpose.xlu0.b32.end [16/16] 0.0, 128
  %v551 = vpop.trf.xlu0
  %v552 = vpop.trf.xlu0
  %v553 = vpop.trf.xlu0
  %v554 = vpop.trf.xlu0
  %v555 = vpop.trf.xlu0
  %v556 = vpop.trf.xlu0
  %v557 = vpop.trf.xlu0
  %v558 = vpop.trf.xlu0
  %v559 = vpop.trf.xlu0
  %v560 = vpop.trf.xlu0
  %v561 = vpop.trf.xlu0
  %v562 = vpop.trf.xlu0
  %v563 = vpop.trf.xlu0
  %v564 = vpop.trf.xlu0
  %v565 = vpop.trf.xlu0
  %v566 = vpop.trf.xlu0
  %567 = vxpose.xlu0.b32.start [1/16] %v290, 128
  %568 = vxpose.xlu0.b32.cont [2/16] %v296, 128
  %569 = vxpose.xlu0.b32.cont [3/16] %v302, 128
  %570 = vxpose.xlu0.b32.cont [4/16] %v308, 128
  %571 = vxpose.xlu0.b32.cont [5/16] %v314, 128
  %572 = vxpose.xlu0.b32.cont [6/16] %v320, 128
  %573 = vxpose.xlu0.b32.cont [7/16] %v326, 128
  %574 = vxpose.xlu0.b32.cont [8/16] %v332, 128
  %575 = vxpose.xlu0.b32.cont [9/16] %v338, 128
  %576 = vxpose.xlu0.b32.cont [10/16] 0.0, 128
  %577 = vxpose.xlu0.b32.cont [11/16] 0.0, 128
  %578 = vxpose.xlu0.b32.cont [12/16] 0.0, 128
  %579 = vxpose.xlu0.b32.cont [13/16] 0.0, 128
  %580 = vxpose.xlu0.b32.cont [14/16] 0.0, 128
  %581 = vxpose.xlu0.b32.cont [15/16] 0.0, 128
  %582 = vxpose.xlu0.b32.end [16/16] 0.0, 128
  %v583 = vpop.trf.xlu0
  %v584 = vpop.trf.xlu0
  %v585 = vpop.trf.xlu0
  %v586 = vpop.trf.xlu0
  %v587 = vpop.trf.xlu0
  %v588 = vpop.trf.xlu0
  %v589 = vpop.trf.xlu0
  %v590 = vpop.trf.xlu0
  %v591 = vpop.trf.xlu0
  %v592 = vpop.trf.xlu0
  %v593 = vpop.trf.xlu0
  %v594 = vpop.trf.xlu0
  %v595 = vpop.trf.xlu0
  %v596 = vpop.trf.xlu0
  %v597 = vpop.trf.xlu0
  %v598 = vpop.trf.xlu0
  %599 = vxpose.xlu0.b32.start [1/16] %v291, 128
  %600 = vxpose.xlu0.b32.cont [2/16] %v297, 128
  %601 = vxpose.xlu0.b32.cont [3/16] %v303, 128
  %602 = vxpose.xlu0.b32.cont [4/16] %v309, 128
  %603 = vxpose.xlu0.b32.cont [5/16] %v315, 128
  %604 = vxpose.xlu0.b32.cont [6/16] %v321, 128
  %605 = vxpose.xlu0.b32.cont [7/16] %v327, 128
  %606 = vxpose.xlu0.b32.cont [8/16] %v333, 128
  %607 = vxpose.xlu0.b32.cont [9/16] %v339, 128
  %608 = vxpose.xlu0.b32.cont [10/16] 0.0, 128
  %609 = vxpose.xlu0.b32.cont [11/16] 0.0, 128
  %610 = vxpose.xlu0.b32.cont [12/16] 0.0, 128
  %611 = vxpose.xlu0.b32.cont [13/16] 0.0, 128
  %612 = vxpose.xlu0.b32.cont [14/16] 0.0, 128
  %613 = vxpose.xlu0.b32.cont [15/16] 0.0, 128
  %614 = vxpose.xlu0.b32.end [16/16] 0.0, 128
  %v615 = vpop.trf.xlu0
  %v616 = vpop.trf.xlu0
  %v617 = vpop.trf.xlu0
  %v618 = vpop.trf.xlu0
  %v619 = vpop.trf.xlu0
  %v620 = vpop.trf.xlu0
  %v621 = vpop.trf.xlu0
  %v622 = vpop.trf.xlu0
  %v623 = vpop.trf.xlu0
  %v624 = vpop.trf.xlu0
  %v625 = vpop.trf.xlu0
  %v626 = vpop.trf.xlu0
  %v627 = vpop.trf.xlu0
  %v628 = vpop.trf.xlu0
  %v629 = vpop.trf.xlu0
  %v630 = vpop.trf.xlu0
  %631 = vxpose.xlu0.b32.start [1/16] %v292, 128
  %632 = vxpose.xlu0.b32.cont [2/16] %v298, 128
  %633 = vxpose.xlu0.b32.cont [3/16] %v304, 128
  %634 = vxpose.xlu0.b32.cont [4/16] %v310, 128
  %635 = vxpose.xlu0.b32.cont [5/16] %v316, 128
  %636 = vxpose.xlu0.b32.cont [6/16] %v322, 128
  %637 = vxpose.xlu0.b32.cont [7/16] %v328, 128
  %638 = vxpose.xlu0.b32.cont [8/16] %v334, 128
  %639 = vxpose.xlu0.b32.cont [9/16] %v340, 128
  %640 = vxpose.xlu0.b32.cont [10/16] 0.0, 128
  %641 = vxpose.xlu0.b32.cont [11/16] 0.0, 128
  %642 = vxpose.xlu0.b32.cont [12/16] 0.0, 128
  %643 = vxpose.xlu0.b32.cont [13/16] 0.0, 128
  %644 = vxpose.xlu0.b32.cont [14/16] 0.0, 128
  %645 = vxpose.xlu0.b32.cont [15/16] 0.0, 128
  %646 = vxpose.xlu0.b32.end [16/16] 0.0, 128
  %v647 = vpop.trf.xlu0
  %v648 = vpop.trf.xlu0
  %v649 = vpop.trf.xlu0
  %v650 = vpop.trf.xlu0
  %v651 = vpop.trf.xlu0
  %v652 = vpop.trf.xlu0
  %v653 = vpop.trf.xlu0
  %v654 = vpop.trf.xlu0
  %v655 = vpop.trf.xlu0
  %v656 = vpop.trf.xlu0
  %v657 = vpop.trf.xlu0
  %v658 = vpop.trf.xlu0
  %v659 = vpop.trf.xlu0
  %v660 = vpop.trf.xlu0
  %v661 = vpop.trf.xlu0
  %v662 = vpop.trf.xlu0
  %663 = vxpose.xlu0.b32.start [1/16] %v293, 128
  %664 = vxpose.xlu0.b32.cont [2/16] %v299, 128
  %665 = vxpose.xlu0.b32.cont [3/16] %v305, 128
  %666 = vxpose.xlu0.b32.cont [4/16] %v311, 128
  %667 = vxpose.xlu0.b32.cont [5/16] %v317, 128
  %668 = vxpose.xlu0.b32.cont [6/16] %v323, 128
  %669 = vxpose.xlu0.b32.cont [7/16] %v329, 128
  %670 = vxpose.xlu0.b32.cont [8/16] %v335, 128
  %671 = vxpose.xlu0.b32.cont [9/16] %v341, 128
  %672 = vxpose.xlu0.b32.cont [10/16] 0.0, 128
  %673 = vxpose.xlu0.b32.cont [11/16] 0.0, 128
  %674 = vxpose.xlu0.b32.cont [12/16] 0.0, 128
  %675 = vxpose.xlu0.b32.cont [13/16] 0.0, 128
  %676 = vxpose.xlu0.b32.cont [14/16] 0.0, 128
  %677 = vxpose.xlu0.b32.cont [15/16] 0.0, 128
  %678 = vxpose.xlu0.b32.end [16/16] 0.0, 128
  %v679 = vpop.trf.xlu0
  %v680 = vpop.trf.xlu0
  %v681 = vpop.trf.xlu0
  %v682 = vpop.trf.xlu0
  %v683 = vpop.trf.xlu0
  %v684 = vpop.trf.xlu0
  %v685 = vpop.trf.xlu0
  %v686 = vpop.trf.xlu0
  %v687 = vpop.trf.xlu0
  %v688 = vpop.trf.xlu0
  %v689 = vpop.trf.xlu0
  %v690 = vpop.trf.xlu0
  %v691 = vpop.trf.xlu0
  %v692 = vpop.trf.xlu0
  %v693 = vpop.trf.xlu0
  %v694 = vpop.trf.xlu0
  %695 = vxpose.xlu0.b32.start [1/16] %v294, 128
  %696 = vxpose.xlu0.b32.cont [2/16] %v300, 128
  %697 = vxpose.xlu0.b32.cont [3/16] %v306, 128
  %698 = vxpose.xlu0.b32.cont [4/16] %v312, 128
  %699 = vxpose.xlu0.b32.cont [5/16] %v318, 128
  %700 = vxpose.xlu0.b32.cont [6/16] %v324, 128
  %701 = vxpose.xlu0.b32.cont [7/16] %v330, 128
  %702 = vxpose.xlu0.b32.cont [8/16] %v336, 128
  %703 = vxpose.xlu0.b32.cont [9/16] %v342, 128
  %704 = vxpose.xlu0.b32.cont [10/16] 0.0, 128
  %705 = vxpose.xlu0.b32.cont [11/16] 0.0, 128
  %706 = vxpose.xlu0.b32.cont [12/16] 0.0, 128
  %707 = vxpose.xlu0.b32.cont [13/16] 0.0, 128
  %708 = vxpose.xlu0.b32.cont [14/16] 0.0, 128
  %709 = vxpose.xlu0.b32.cont [15/16] 0.0, 128
  %710 = vxpose.xlu0.b32.end [16/16] 0.0, 128
  %v711 = vpop.trf.xlu0
  %v712 = vpop.trf.xlu0
  %v713 = vpop.trf.xlu0
  %v714 = vpop.trf.xlu0
  %v715 = vpop.trf.xlu0
  %v716 = vpop.trf.xlu0
  %v717 = vpop.trf.xlu0
  %v718 = vpop.trf.xlu0
  %v719 = vpop.trf.xlu0
  %v720 = vpop.trf.xlu0
  %v721 = vpop.trf.xlu0
  %v722 = vpop.trf.xlu0
  %v723 = vpop.trf.xlu0
  %v724 = vpop.trf.xlu0
  %v725 = vpop.trf.xlu0
  %v726 = vpop.trf.xlu0
  %727 = vst [vmem:[%s2] sm:$0xff] %v359
  %vm728 = vcmask 556032
  %729 = vst.msk [vmem:[%s2 + $0x8] sm:$0xff] %vm728, %v551
  %730 = vst [vmem:[%s2 + $0x10] sm:$0xff] %v360
  %731 = vst.msk [vmem:[%s2 + $0x18] sm:$0xff] %vm728, %v552
  %732 = vst [vmem:[%s2 + $0x20] sm:$0xff] %v361
  %733 = vst.msk [vmem:[%s2 + $0x28] sm:$0xff] %vm728, %v553
  %734 = vst [vmem:[%s2 + $0x30] sm:$0xff] %v362
  %735 = vst.msk [vmem:[%s2 + $0x38] sm:$0xff] %vm728, %v554
  %736 = vst [vmem:[%s2 + $0x40] sm:$0xff] %v363
  %737 = vst.msk [vmem:[%s2 + $0x48] sm:$0xff] %vm728, %v555
  %738 = vst [vmem:[%s2 + $0x50] sm:$0xff] %v364
  %739 = vst.msk [vmem:[%s2 + $0x58] sm:$0xff] %vm728, %v556
  %740 = vst [vmem:[%s2 + $0x60] sm:$0xff] %v365
  %741 = vst.msk [vmem:[%s2 + $0x68] sm:$0xff] %vm728, %v557
  %742 = vst [vmem:[%s2 + $0x70] sm:$0xff] %v366
  %743 = vst.msk [vmem:[%s2 + $0x78] sm:$0xff] %vm728, %v558
  %744 = vst [vmem:[%s2 + $0x80] sm:$0xff] %v367
  %745 = vst.msk [vmem:[%s2 + $0x88] sm:$0xff] %vm728, %v559
  %746 = vst [vmem:[%s2 + $0x90] sm:$0xff] %v368
  %747 = vst.msk [vmem:[%s2 + $0x98] sm:$0xff] %vm728, %v560
  %748 = vst [vmem:[%s2 + $0xa0] sm:$0xff] %v369
  %749 = vst.msk [vmem:[%s2 + $0xa8] sm:$0xff] %vm728, %v561
  %750 = vst [vmem:[%s2 + $0xb0] sm:$0xff] %v370
  %751 = vst.msk [vmem:[%s2 + $0xb8] sm:$0xff] %vm728, %v562
  %752 = vst [vmem:[%s2 + $0xc0] sm:$0xff] %v371
  %753 = vst.msk [vmem:[%s2 + $0xc8] sm:$0xff] %vm728, %v563
  %754 = vst [vmem:[%s2 + $0xd0] sm:$0xff] %v372
  %755 = vst.msk [vmem:[%s2 + $0xd8] sm:$0xff] %vm728, %v564
  %756 = vst [vmem:[%s2 + $0xe0] sm:$0xff] %v373
  %757 = vst.msk [vmem:[%s2 + $0xe8] sm:$0xff] %vm728, %v565
  %758 = vst [vmem:[%s2 + $0xf0] sm:$0xff] %v374
  %759 = vst.msk [vmem:[%s2 + $0xf8] sm:$0xff] %vm728, %v566
  %760 = vst [vmem:[%s2 + $0x100] sm:$0xff] %v391
  %761 = vst.msk [vmem:[%s2 + $0x108] sm:$0xff] %vm728, %v583
  %762 = vst [vmem:[%s2 + $0x110] sm:$0xff] %v392
  %763 = vst.msk [vmem:[%s2 + $0x118] sm:$0xff] %vm728, %v584
  %764 = vst [vmem:[%s2 + $0x120] sm:$0xff] %v393
  %765 = vst.msk [vmem:[%s2 + $0x128] sm:$0xff] %vm728, %v585
  %766 = vst [vmem:[%s2 + $0x130] sm:$0xff] %v394
  %767 = vst.msk [vmem:[%s2 + $0x138] sm:$0xff] %vm728, %v586
  %768 = vst [vmem:[%s2 + $0x140] sm:$0xff] %v395
  %769 = vst.msk [vmem:[%s2 + $0x148] sm:$0xff] %vm728, %v587
  %770 = vst [vmem:[%s2 + $0x150] sm:$0xff] %v396
  %771 = vst.msk [vmem:[%s2 + $0x158] sm:$0xff] %vm728, %v588
  %772 = vst [vmem:[%s2 + $0x160] sm:$0xff] %v397
  %773 = vst.msk [vmem:[%s2 + $0x168] sm:$0xff] %vm728, %v589
  %774 = vst [vmem:[%s2 + $0x170] sm:$0xff] %v398
  %775 = vst.msk [vmem:[%s2 + $0x178] sm:$0xff] %vm728, %v590
  %776 = vst [vmem:[%s2 + $0x180] sm:$0xff] %v399
  %777 = vst.msk [vmem:[%s2 + $0x188] sm:$0xff] %vm728, %v591
  %778 = vst [vmem:[%s2 + $0x190] sm:$0xff] %v400
  %779 = vst.msk [vmem:[%s2 + $0x198] sm:$0xff] %vm728, %v592
  %780 = vst [vmem:[%s2 + $0x1a0] sm:$0xff] %v401
  %781 = vst.msk [vmem:[%s2 + $0x1a8] sm:$0xff] %vm728, %v593
  %782 = vst [vmem:[%s2 + $0x1b0] sm:$0xff] %v402
  %783 = vst.msk [vmem:[%s2 + $0x1b8] sm:$0xff] %vm728, %v594
  %784 = vst [vmem:[%s2 + $0x1c0] sm:$0xff] %v403
  %785 = vst.msk [vmem:[%s2 + $0x1c8] sm:$0xff] %vm728, %v595
  %786 = vst [vmem:[%s2 + $0x1d0] sm:$0xff] %v404
  %787 = vst.msk [vmem:[%s2 + $0x1d8] sm:$0xff] %vm728, %v596
  %788 = vst [vmem:[%s2 + $0x1e0] sm:$0xff] %v405
  %789 = vst.msk [vmem:[%s2 + $0x1e8] sm:$0xff] %vm728, %v597
  %790 = vst [vmem:[%s2 + $0x1f0] sm:$0xff] %v406
  %791 = vst.msk [vmem:[%s2 + $0x1f8] sm:$0xff] %vm728, %v598
  %792 = vst [vmem:[%s2 + $0x200] sm:$0xff] %v423
  %793 = vst.msk [vmem:[%s2 + $0x208] sm:$0xff] %vm728, %v615
  %794 = vst [vmem:[%s2 + $0x210] sm:$0xff] %v424
  %795 = vst.msk [vmem:[%s2 + $0x218] sm:$0xff] %vm728, %v616
  %796 = vst [vmem:[%s2 + $0x220] sm:$0xff] %v425
  %797 = vst.msk [vmem:[%s2 + $0x228] sm:$0xff] %vm728, %v617
  %798 = vst [vmem:[%s2 + $0x230] sm:$0xff] %v426
  %799 = vst.msk [vmem:[%s2 + $0x238] sm:$0xff] %vm728, %v618
  %800 = vst [vmem:[%s2 + $0x240] sm:$0xff] %v427
  %801 = vst.msk [vmem:[%s2 + $0x248] sm:$0xff] %vm728, %v619
  %802 = vst [vmem:[%s2 + $0x250] sm:$0xff] %v428
  %803 = vst.msk [vmem:[%s2 + $0x258] sm:$0xff] %vm728, %v620
  %804 = vst [vmem:[%s2 + $0x260] sm:$0xff] %v429
  %805 = vst.msk [vmem:[%s2 + $0x268] sm:$0xff] %vm728, %v621
  %806 = vst [vmem:[%s2 + $0x270] sm:$0xff] %v430
  %807 = vst.msk [vmem:[%s2 + $0x278] sm:$0xff] %vm728, %v622
  %808 = vst [vmem:[%s2 + $0x280] sm:$0xff] %v431
  %809 = vst.msk [vmem:[%s2 + $0x288] sm:$0xff] %vm728, %v623
  %810 = vst [vmem:[%s2 + $0x290] sm:$0xff] %v432
  %811 = vst.msk [vmem:[%s2 + $0x298] sm:$0xff] %vm728, %v624
  %812 = vst [vmem:[%s2 + $0x2a0] sm:$0xff] %v433
  %813 = vst.msk [vmem:[%s2 + $0x2a8] sm:$0xff] %vm728, %v625
  %814 = vst [vmem:[%s2 + $0x2b0] sm:$0xff] %v434
  %815 = vst.msk [vmem:[%s2 + $0x2b8] sm:$0xff] %vm728, %v626
  %816 = vst [vmem:[%s2 + $0x2c0] sm:$0xff] %v435
  %817 = vst.msk [vmem:[%s2 + $0x2c8] sm:$0xff] %vm728, %v627
  %818 = vst [vmem:[%s2 + $0x2d0] sm:$0xff] %v436
  %819 = vst.msk [vmem:[%s2 + $0x2d8] sm:$0xff] %vm728, %v628
  %820 = vst [vmem:[%s2 + $0x2e0] sm:$0xff] %v437
  %821 = vst.msk [vmem:[%s2 + $0x2e8] sm:$0xff] %vm728, %v629
  %822 = vst [vmem:[%s2 + $0x2f0] sm:$0xff] %v438
  %823 = vst.msk [vmem:[%s2 + $0x2f8] sm:$0xff] %vm728, %v630
  %824 = vst [vmem:[%s2 + $0x300] sm:$0xff] %v455
  %825 = vst.msk [vmem:[%s2 + $0x308] sm:$0xff] %vm728, %v647
  %826 = vst [vmem:[%s2 + $0x310] sm:$0xff] %v456
  %827 = vst.msk [vmem:[%s2 + $0x318] sm:$0xff] %vm728, %v648
  %828 = vst [vmem:[%s2 + $0x320] sm:$0xff] %v457
  %829 = vst.msk [vmem:[%s2 + $0x328] sm:$0xff] %vm728, %v649
  %830 = vst [vmem:[%s2 + $0x330] sm:$0xff] %v458
  %831 = vst.msk [vmem:[%s2 + $0x338] sm:$0xff] %vm728, %v650
  %832 = vst [vmem:[%s2 + $0x340] sm:$0xff] %v459
  %833 = vst.msk [vmem:[%s2 + $0x348] sm:$0xff] %vm728, %v651
  %834 = vst [vmem:[%s2 + $0x350] sm:$0xff] %v460
  %835 = vst.msk [vmem:[%s2 + $0x358] sm:$0xff] %vm728, %v652
  %836 = vst [vmem:[%s2 + $0x360] sm:$0xff] %v461
  %837 = vst.msk [vmem:[%s2 + $0x368] sm:$0xff] %vm728, %v653
  %838 = vst [vmem:[%s2 + $0x370] sm:$0xff] %v462
  %839 = vst.msk [vmem:[%s2 + $0x378] sm:$0xff] %vm728, %v654
  %840 = vst [vmem:[%s2 + $0x380] sm:$0xff] %v463
  %841 = vst.msk [vmem:[%s2 + $0x388] sm:$0xff] %vm728, %v655
  %842 = vst [vmem:[%s2 + $0x390] sm:$0xff] %v464
  %843 = vst.msk [vmem:[%s2 + $0x398] sm:$0xff] %vm728, %v656
  %844 = vst [vmem:[%s2 + $0x3a0] sm:$0xff] %v465
  %845 = vst.msk [vmem:[%s2 + $0x3a8] sm:$0xff] %vm728, %v657
  %846 = vst [vmem:[%s2 + $0x3b0] sm:$0xff] %v466
  %847 = vst.msk [vmem:[%s2 + $0x3b8] sm:$0xff] %vm728, %v658
  %848 = vst [vmem:[%s2 + $0x3c0] sm:$0xff] %v467
  %849 = vst.msk [vmem:[%s2 + $0x3c8] sm:$0xff] %vm728, %v659
  %850 = vst [vmem:[%s2 + $0x3d0] sm:$0xff] %v468
  %851 = vst.msk [vmem:[%s2 + $0x3d8] sm:$0xff] %vm728, %v660
  %852 = vst [vmem:[%s2 + $0x3e0] sm:$0xff] %v469
  %853 = vst.msk [vmem:[%s2 + $0x3e8] sm:$0xff] %vm728, %v661
  %854 = vst [vmem:[%s2 + $0x3f0] sm:$0xff] %v470
  %855 = vst.msk [vmem:[%s2 + $0x3f8] sm:$0xff] %vm728, %v662
  %856 = vst [vmem:[%s2 + $0x400] sm:$0xff] %v487
  %857 = vst.msk [vmem:[%s2 + $0x408] sm:$0xff] %vm728, %v679
  %858 = vst [vmem:[%s2 + $0x410] sm:$0xff] %v488
  %859 = vst.msk [vmem:[%s2 + $0x418] sm:$0xff] %vm728, %v680
  %860 = vst [vmem:[%s2 + $0x420] sm:$0xff] %v489
  %861 = vst.msk [vmem:[%s2 + $0x428] sm:$0xff] %vm728, %v681
  %862 = vst [vmem:[%s2 + $0x430] sm:$0xff] %v490
  %863 = vst.msk [vmem:[%s2 + $0x438] sm:$0xff] %vm728, %v682
  %864 = vst [vmem:[%s2 + $0x440] sm:$0xff] %v491
  %865 = vst.msk [vmem:[%s2 + $0x448] sm:$0xff] %vm728, %v683
  %866 = vst [vmem:[%s2 + $0x450] sm:$0xff] %v492
  %867 = vst.msk [vmem:[%s2 + $0x458] sm:$0xff] %vm728, %v684
  %868 = vst [vmem:[%s2 + $0x460] sm:$0xff] %v493
  %869 = vst.msk [vmem:[%s2 + $0x468] sm:$0xff] %vm728, %v685
  %870 = vst [vmem:[%s2 + $0x470] sm:$0xff] %v494
  %871 = vst.msk [vmem:[%s2 + $0x478] sm:$0xff] %vm728, %v686
  %872 = vst [vmem:[%s2 + $0x480] sm:$0xff] %v495
  %873 = vst.msk [vmem:[%s2 + $0x488] sm:$0xff] %vm728, %v687
  %874 = vst [vmem:[%s2 + $0x490] sm:$0xff] %v496
  %875 = vst.msk [vmem:[%s2 + $0x498] sm:$0xff] %vm728, %v688
  %876 = vst [vmem:[%s2 + $0x4a0] sm:$0xff] %v497
  %877 = vst.msk [vmem:[%s2 + $0x4a8] sm:$0xff] %vm728, %v689
  %878 = vst [vmem:[%s2 + $0x4b0] sm:$0xff] %v498
  %879 = vst.msk [vmem:[%s2 + $0x4b8] sm:$0xff] %vm728, %v690
  %880 = vst [vmem:[%s2 + $0x4c0] sm:$0xff] %v499
  %881 = vst.msk [vmem:[%s2 + $0x4c8] sm:$0xff] %vm728, %v691
  %882 = vst [vmem:[%s2 + $0x4d0] sm:$0xff] %v500
  %883 = vst.msk [vmem:[%s2 + $0x4d8] sm:$0xff] %vm728, %v692
  %884 = vst [vmem:[%s2 + $0x4e0] sm:$0xff] %v501
  %885 = vst.msk [vmem:[%s2 + $0x4e8] sm:$0xff] %vm728, %v693
  %886 = vst [vmem:[%s2 + $0x4f0] sm:$0xff] %v502
  %887 = vst.msk [vmem:[%s2 + $0x4f8] sm:$0xff] %vm728, %v694
  %888 = vst [vmem:[%s2 + $0x500] sm:$0xff] %v519
  %889 = vst.msk [vmem:[%s2 + $0x508] sm:$0xff] %vm728, %v711
  %890 = vst [vmem:[%s2 + $0x510] sm:$0xff] %v520
  %891 = vst.msk [vmem:[%s2 + $0x518] sm:$0xff] %vm728, %v712
  %892 = vst [vmem:[%s2 + $0x520] sm:$0xff] %v521
  %893 = vst.msk [vmem:[%s2 + $0x528] sm:$0xff] %vm728, %v713
  %894 = vst [vmem:[%s2 + $0x530] sm:$0xff] %v522
  %895 = vst.msk [vmem:[%s2 + $0x538] sm:$0xff] %vm728, %v714
  %896 = vst [vmem:[%s2 + $0x540] sm:$0xff] %v523
  %897 = vst.msk [vmem:[%s2 + $0x548] sm:$0xff] %vm728, %v715
  %898 = vst [vmem:[%s2 + $0x550] sm:$0xff] %v524
  %899 = vst.msk [vmem:[%s2 + $0x558] sm:$0xff] %vm728, %v716
  %900 = vst [vmem:[%s2 + $0x560] sm:$0xff] %v525
  %901 = vst.msk [vmem:[%s2 + $0x568] sm:$0xff] %vm728, %v717
  %902 = vst [vmem:[%s2 + $0x570] sm:$0xff] %v526
  %903 = vst.msk [vmem:[%s2 + $0x578] sm:$0xff] %vm728, %v718
  %904 = vst [vmem:[%s2 + $0x580] sm:$0xff] %v527
  %905 = vst.msk [vmem:[%s2 + $0x588] sm:$0xff] %vm728, %v719
  %906 = vst [vmem:[%s2 + $0x590] sm:$0xff] %v528
  %907 = vst.msk [vmem:[%s2 + $0x598] sm:$0xff] %vm728, %v720
  %908 = vst [vmem:[%s2 + $0x5a0] sm:$0xff] %v529
  %909 = vst.msk [vmem:[%s2 + $0x5a8] sm:$0xff] %vm728, %v721
  %910 = vst [vmem:[%s2 + $0x5b0] sm:$0xff] %v530
  %911 = vst.msk [vmem:[%s2 + $0x5b8] sm:$0xff] %vm728, %v722
  %912 = vst [vmem:[%s2 + $0x5c0] sm:$0xff] %v531
  %913 = vst.msk [vmem:[%s2 + $0x5c8] sm:$0xff] %vm728, %v723
  %914 = vst [vmem:[%s2 + $0x5d0] sm:$0xff] %v532
  %915 = vst.msk [vmem:[%s2 + $0x5d8] sm:$0xff] %vm728, %v724
  %916 = vst [vmem:[%s2 + $0x5e0] sm:$0xff] %v533
  %917 = vst.msk [vmem:[%s2 + $0x5e8] sm:$0xff] %vm728, %v725
  %918 = vst [vmem:[%s2 + $0x5f0] sm:$0xff] %v534
  %919 = vst.msk [vmem:[%s2 + $0x5f8] sm:$0xff] %vm728, %v726
  // Predicated region
  $region10: #{tpu_custom_call.1} parent=0 // pred_check
    _
  $region11: #{tpu_custom_call.1} parent=0 // pred_check_branch
    %921 = sbr.rel (0) target = $region13
  $region12: #{tpu_custom_call.1} parent=0 // pred_region
    _
  $region13: #{tpu_custom_call.1} parent=0 // pred_fallthru
    _
  // Predicated region
  $region14: #{tpu_custom_call.1} parent=0 // pred_check
    _
  $region15: #{tpu_custom_call.1} parent=0 // pred_check_branch
    %923 = sbr.rel (0) target = $region17
  $region16: #{tpu_custom_call.1} parent=0 // pred_region
    _
  $region17: #{tpu_custom_call.1} parent=0 // pred_fallthru
    _

</llo_original>
